<compile_context>
chip_gen: v5e
topology: v5e:2x2
jax: 0.10.0
libtpu: 0.0.40
codegen_flags: <defaults>
</compile_context>

<pallas_src>
import functools

import jax
import jax.numpy as jnp
from jax.experimental import pallas as pl
from jax.experimental.pallas import tpu as pltpu

_LANE = 128
_SUBLANE = 8
_MAX_BLOCK_ROWS = 2048          # 2048*128*4B = 1 MiB per f32 input block


def _temporal_loss_kernel(pre_ref, aug_ref, acc_ref, *,
                          thr, tr, rows, blocks_per_p, mask_rows):
    i = pl.program_id(1)

    @pl.when(i == 0)
    def _():
        acc_ref[...] = jnp.zeros_like(acc_ref)

    pre = pre_ref[...].astype(jnp.float32)
    aug = aug_ref[...].astype(jnp.float32)
    temp = jnp.abs(pre - aug)
    # |where(temp >= thr, aug, pre) - aug|  ==  where(temp >= thr, 0, temp)
    contrib = jnp.where(temp >= jnp.float32(thr), jnp.float32(0.0), temp)

    if mask_rows:
        # Zero rows past the true extent (ragged last block / duplicated
        # clamped blocks of the parallel split).
        p = pl.program_id(0)
        b = p * blocks_per_p + i                      # logical block id
        row0 = b * tr
        row_ids = row0 + jax.lax.broadcasted_iota(jnp.int32, (tr, _LANE), 0)
        contrib = jnp.where(row_ids < rows, contrib, jnp.float32(0.0))

    if tr % _SUBLANE == 0:
        # Reduce (tr,128) -> (8,128): pure vreg-tile adds on the VPU.
        acc_ref[...] += contrib.reshape(tr // _SUBLANE, _SUBLANE, _LANE).sum(axis=0)
    else:
        # Tiny single-block case (rows < 8): accumulate into sublane 0 only.
        acc_ref[0:1, :] += contrib.sum(axis=0, keepdims=True)


def temporal_loss(pre, pre_aug, thr=2.0, *, num_parallel=2):
    """Pallas implementation of temporal_loss.forward (L1Loss reduction='mean')."""
    assert pre.shape == pre_aug.shape
    n = int(pre.size)
    assert n > 0

    flat_pre = pre.reshape(-1)          # native dtype; reshape is free
    flat_aug = pre_aug.reshape(-1)

    # Pad only the <128-element lane-ragged tail (zeros contribute exactly 0).
    # In the common n % 128 == 0 case no HBM copy is made at all.
    rem = n % _LANE
    if rem:
        flat_pre = jnp.pad(flat_pre, (0, _LANE - rem))
        flat_aug = jnp.pad(flat_aug, (0, _LANE - rem))

    rows = flat_pre.shape[0] // _LANE
    pre2 = flat_pre.reshape(rows, _LANE)
    aug2 = flat_aug.reshape(rows, _LANE)

    if rows >= _SUBLANE:
        tr = min(_MAX_BLOCK_ROWS, (rows // _SUBLANE) * _SUBLANE)
    else:
        tr = rows                       # block equals full sublane extent
    num_blocks = -(-rows // tr)

    p_axis = num_parallel if num_blocks >= num_parallel else 1
    blocks_per_p = -(-num_blocks // p_axis)
    mask_rows = (p_axis * blocks_per_p * tr) != rows

    kernel = functools.partial(
        _temporal_loss_kernel, thr=float(thr), tr=tr, rows=rows,
        blocks_per_p=blocks_per_p, mask_rows=mask_rows)

    def in_map(p, i):
        b = p * blocks_per_p + i
        # Clamp so any duplicated trailing grid step re-reads a valid block;
        # its contribution is zeroed by the in-kernel row mask.
        return (jnp.minimum(b, num_blocks - 1), 0)

    partials = pl.pallas_call(
        kernel,
        out_shape=jax.ShapeDtypeStruct((p_axis * _SUBLANE, _LANE), jnp.float32),
        grid_spec=pltpu.PrefetchScalarGridSpec(
            num_scalar_prefetch=0,
            grid=(p_axis, blocks_per_p),
            in_specs=[pl.BlockSpec((tr, _LANE), in_map),
                      pl.BlockSpec((tr, _LANE), in_map)],
            out_specs=pl.BlockSpec((_SUBLANE, _LANE), lambda p, i: (p, 0)),
        ),
        compiler_params=pltpu.CompilerParams(
            dimension_semantics=("parallel", "arbitrary")),
    )(pre2, aug2)

    # L1Loss(reduction='mean'): divide by the true (un-padded) element count.
    # torch.squeeze does not change the element count, so it is a no-op here.
    return jnp.sum(partials) / jnp.float32(n)


def _reference(pre, pre_aug, thr=2.0):
    """Pure-JAX mirror of the PyTorch module."""
    temp = jnp.abs(pre - pre_aug)
    sel = jnp.where(temp >= thr, pre_aug, pre)
    return jnp.mean(jnp.abs(jnp.squeeze(sel) - jnp.squeeze(pre_aug)))


if __name__ == "__main__":
    key = jax.random.PRNGKey(0)
    k1, k2 = jax.random.split(key)

    # Small shapes consistent with the module's elementwise forward.
    shape = (2, 4, 16, 16)
    pre = jax.random.normal(k1, shape, dtype=jnp.float32)
    pre_aug = jax.random.normal(k2, shape, dtype=jnp.float32)

    loss = temporal_loss(pre, pre_aug, thr=2.0)
    jax.block_until_ready(loss)
    ref = _reference(pre, pre_aug, thr=2.0)
    assert jnp.allclose(loss, ref, rtol=1e-5, atol=1e-6), (loss, ref)

    # Ragged shape: exercises lane-tail pad, masked ragged block, and the
    # 2-way parallel accumulator path.
    k3, k4 = jax.random.split(k2)
    shape2 = (3, 5, 7, 11)
    pre_b = jax.random.normal(k3, shape2, dtype=jnp.float32) * 2.0
    aug_b = jax.random.normal(k4, shape2, dtype=jnp.float32) * 2.0
    loss2 = temporal_loss(pre_b, aug_b, thr=2.0)
    jax.block_until_ready(loss2)
    ref2 = _reference(pre_b, aug_b, thr=2.0)
    assert jnp.allclose(loss2, ref2, rtol=1e-5, atol=1e-6), (loss2, ref2)

    print("KERNEL_OK")
</pallas_src>

<mosaic_0001>
module attributes {stable_mosaic.version = 11 : i64} {
  func.func @_temporal_loss_kernel(%arg0: i32, %arg1: i32, %arg2: memref<16x128xf32, #tpu.memory_space<vmem>>, %arg3: memref<16x128xf32, #tpu.memory_space<vmem>>, %arg4: memref<8x128xf32, #tpu.memory_space<vmem>>) attributes {dimension_semantics = [#tpu.dimension_semantics<parallel>, #tpu.dimension_semantics<arbitrary>], iteration_bounds = array<i64: 1, 1>, scalar_prefetch = 0 : i64, scratch_operands = 0 : i64, tpu.core_type = #tpu.core_type<tc>, window_params = [{transform_indices = @transform_0, window_bounds = array<i64: 16, 128>}, {transform_indices = @transform_1, window_bounds = array<i64: 16, 128>}, {transform_indices = @transform_2, window_bounds = array<i64: 8, 128>}]} {
    %c0_i32 = arith.constant 0 : i32
    %0 = arith.cmpi eq, %arg1, %c0_i32 : i32
    %1 = arith.extui %0 : i1 to i32
    %c0_i32_0 = arith.constant 0 : i32
    %2 = arith.cmpi ne, %1, %c0_i32_0 : i32
    scf.if %2 {
      %cst_10 = arith.constant 0.000000e+00 : f32
      %16 = vector.broadcast %cst_10 : f32 to vector<8x128xf32>
      %c0_11 = arith.constant 0 : index
      %c0_12 = arith.constant 0 : index
      %17 = vector.load %arg4[%c0_11, %c0_12] : memref<8x128xf32, #tpu.memory_space<vmem>>, vector<8x128xf32>
      tpu.vector_store %arg4[%c0_11, %c0_12], %16 {strides = array<i32>} : memref<8x128xf32, #tpu.memory_space<vmem>>, vector<8x128xf32>,
    } else {
    }
    %c0 = arith.constant 0 : index
    %c0_1 = arith.constant 0 : index
    %3 = vector.load %arg2[%c0, %c0_1] : memref<16x128xf32, #tpu.memory_space<vmem>>, vector<16x128xf32>
    %c0_2 = arith.constant 0 : index
    %c0_3 = arith.constant 0 : index
    %4 = vector.load %arg3[%c0_2, %c0_3] : memref<16x128xf32, #tpu.memory_space<vmem>>, vector<16x128xf32>
    %5 = arith.subf %3, %4 : vector<16x128xf32>
    %6 = math.absf %5 : vector<16x128xf32>
    %cst = arith.constant 2.000000e+00 : f32
    %7 = vector.broadcast %cst : f32 to vector<16x128xf32>
    %8 = arith.cmpf oge, %6, %7 : vector<16x128xf32>
    %cst_4 = arith.constant 0.000000e+00 : f32
    %9 = vector.broadcast %cst_4 : f32 to vector<16x128xf32>
    %10 = arith.select %8, %9, %6 : vector<16x128xi1>, vector<16x128xf32>
    %c0_5 = arith.constant 0 : index
    %c0_6 = arith.constant 0 : index
    %11 = vector.load %arg4[%c0_5, %c0_6] : memref<8x128xf32, #tpu.memory_space<vmem>>, vector<8x128xf32>
    %12 = vector.shape_cast %10 : vector<16x128xf32> to vector<2x8x128xf32>
    %cst_7 = arith.constant dense<0.000000e+00> : vector<8x128xf32>
    %13 = vector.multi_reduction <add>, %12, %cst_7 [0] : vector<2x8x128xf32> to vector<8x128xf32>
    %14 = arith.addf %11, %13 : vector<8x128xf32>
    %c0_8 = arith.constant 0 : index
    %c0_9 = arith.constant 0 : index
    %15 = vector.load %arg4[%c0_8, %c0_9] : memref<8x128xf32, #tpu.memory_space<vmem>>, vector<8x128xf32>
    tpu.vector_store %arg4[%c0_8, %c0_9], %14 {strides = array<i32>} : memref<8x128xf32, #tpu.memory_space<vmem>>, vector<8x128xf32>,
    return
  }
  func.func @transform_0(%arg0: i32, %arg1: i32) -> (i32, i32) {
    %c1_i32 = arith.constant 1 : i32
    %0 = arith.muli %arg0, %c1_i32 : i32
    %1 = arith.addi %0, %arg1 : i32
    %c0_i32 = arith.constant 0 : i32
    %2 = arith.minsi %1, %c0_i32 : i32
    %c0_i32_0 = arith.constant 0 : i32
    %c0_i32_1 = arith.constant 0 : i32
    return %2, %c0_i32_0 : i32, i32
  }
  func.func @transform_1(%arg0: i32, %arg1: i32) -> (i32, i32) {
    %c1_i32 = arith.constant 1 : i32
    %0 = arith.muli %arg0, %c1_i32 : i32
    %1 = arith.addi %0, %arg1 : i32
    %c0_i32 = arith.constant 0 : i32
    %2 = arith.minsi %1, %c0_i32 : i32
    %c0_i32_0 = arith.constant 0 : i32
    %c0_i32_1 = arith.constant 0 : i32
    return %2, %c0_i32_0 : i32, i32
  }
  func.func @transform_2(%arg0: i32, %arg1: i32) -> (i32, i32) {
    %c0_i32 = arith.constant 0 : i32
    %c0_i32_0 = arith.constant 0 : i32
    return %arg0, %c0_i32 : i32, i32
  }
}

</mosaic_0001>

<llo_original>
// kernel: tpu_custom_call.1
$region0: #{tpu_custom_call.1}
  #allocation0 [shape = 'u32[]', space=smem, size = 0x4, offset = 0x4, fixed_abs, tag = 'smem constant byte address 0x4 - core index']
  #allocation1 [shape = 'u32[72,128]{1,0:T(1,128)}', space=vmem, size = 0x9000, scoped, tag = 'internal scratch']
  %s0 = inlined_call_operand.hbm [shape: f32[16,128], index: 0, kind: input, shape index: {}]
  %s1 = inlined_call_operand.hbm [shape: f32[16,128], index: 1, kind: input, shape index: {}]
  %s2 = inlined_call_operand.hbm [shape: f32[8,128], index: 2, kind: output, shape index: {}]
  %s3 = sld [smem:[#allocation0]]
  $region30: #{tpu_custom_call.1} parent=0
    _
  %s5 = ssub.s32 1, %s3
  %s6 = scalar_select 0, %s5, %s3
  $region1: #{tpu_custom_call.1} parent=0
    #allocation2 [shape = 'u8[8192]{0}', space=vmem, size = 0x2000, scoped, tag = 'input window, operand 0, single buffered']
    #allocation3 [shape = 's32[1]{0}', space=sflag, size = 0x4, scoped, tag = 'scoped memory for tpu_custom_call.1']
    #allocation4 [shape = 's32[1]{0}', space=sflag, size = 0x4, scoped, tag = 'scoped memory for tpu_custom_call.1']
    #allocation5 [shape = 'u8[8192]{0}', space=vmem, size = 0x2000, scoped, tag = 'input window, operand 1, single buffered']
    #allocation6 [shape = 's32[1]{0}', space=sflag, size = 0x4, scoped, tag = 'scoped memory for tpu_custom_call.1']
    #allocation7 [shape = 'u8[4096]{0}', space=vmem, size = 0x1000, scoped, tag = 'output window, operand 0, single buffered']
    %7 = vsyncpa [#allocation3], 0
    %8 = vsyncpa [#allocation6], 0
    %9 = vsyncpa [#allocation4], 0
    // Predicated region
    $region2: #{tpu_custom_call.1} parent=1 // pred_check
      _
    $region3: #{tpu_custom_call.1} parent=1 // pred_check_branch
      %11 = sbr.rel (0) target = $region5
    $region4: #{tpu_custom_call.1} parent=1 // pred_region
      %s12 = sadd.s32 0, 0
      %p13 = scmp.lt.s32.totalorder %s12, 0
      %s14 = scalar_select %p13, %s12, 0
      %s15 = smul.u32 2, %s14
      %17 = vsyncadd [#allocation3], 0
      %s18 = smul.addr %s15, 8
      %s19 = scalar_lea.hbm %s0, %s18
      %s20 = sshll.u32 %s19, 4
      %s21 = int_to_ptr.hbm [resolvable:$true] %s20
      %s22 = sshll.u32 [#allocation2], 4
      %s23 = int_to_ptr.vmem [resolvable:$true] %s22
      %28 = dma.hbm_to_vmem [thread:$0]  %s21, 256, %s23, [#allocation3], 128, 128, 8
    $region5: #{tpu_custom_call.1} parent=1 // pred_fallthru
      _
    // Predicated region
    $region6: #{tpu_custom_call.1} parent=1 // pred_check
      _
    $region7: #{tpu_custom_call.1} parent=1 // pred_check_branch
      %30 = sbr.rel (0) target = $region9
    $region8: #{tpu_custom_call.1} parent=1 // pred_region
      %s31 = sadd.s32 0, 0
      %p32 = scmp.lt.s32.totalorder %s31, 0
      %s33 = scalar_select %p32, %s31, 0
      %s34 = smul.u32 2, %s33
      %36 = vsyncadd [#allocation6], 0
      %s37 = smul.addr %s34, 8
      %s38 = scalar_lea.hbm %s1, %s37
      %s39 = sshll.u32 %s38, 4
      %s40 = int_to_ptr.hbm [resolvable:$true] %s39
      %s41 = sshll.u32 [#allocation5], 4
      %s42 = int_to_ptr.vmem [resolvable:$true] %s41
      %47 = dma.hbm_to_vmem [thread:$0]  %s40, 256, %s42, [#allocation6], 128, 128, 8
    $region9: #{tpu_custom_call.1} parent=1 // pred_fallthru
      _
    // Predicated region
    $region10: #{tpu_custom_call.1} parent=1 // pred_check
      _
    $region11: #{tpu_custom_call.1} parent=1 // pred_check_branch
      %49 = sbr.rel (0) target = $region13
    $region12: #{tpu_custom_call.1} parent=1 // pred_region
      %51 = dma.done [#allocation3], 256
    $region13: #{tpu_custom_call.1} parent=1 // pred_fallthru
      _
    // Predicated region
    $region14: #{tpu_custom_call.1} parent=1 // pred_check
      _
    $region15: #{tpu_custom_call.1} parent=1 // pred_check_branch
      %53 = sbr.rel (0) target = $region17
    $region16: #{tpu_custom_call.1} parent=1 // pred_region
      %55 = dma.done [#allocation6], 256
    $region17: #{tpu_custom_call.1} parent=1 // pred_fallthru
      _
    %s56 = sadd.s32 0, 0
    %p57 = scmp.lt.s32.totalorder %s56, 0
    %s58 = scalar_select %p57, %s56, 0
    %s59 = smul.u32 2, %s58
    %s60 = sadd.s32 0, 0
    %p61 = scmp.lt.s32.totalorder %s60, 0
    %s62 = scalar_select %p61, %s60, 0
    %s63 = smul.u32 2, %s62
    %p64 = scmp.eq.s32.totalorder 0, 0
    // Predicated region
    $region18: #{tpu_custom_call.1} parent=1 // pred_check
      %p65 = pneg %p64
    $region19: #{tpu_custom_call.1} parent=1 // pred_check_branch
      %67 = sbr.rel (%p65) target = $region21
    $region20: #{tpu_custom_call.1} parent=1 // pred_region
      %68 = vst [vmem:[#allocation7] sm:$0xff] 0.0
    $region21: #{tpu_custom_call.1} parent=1 // pred_fallthru
      _
    %v69 = vld [vmem:[#allocation2] sm:$0xff]
    %v70 = vld [vmem:[#allocation2 + $0x8] sm:$0xff]
    %v71 = vld [vmem:[#allocation5] sm:$0xff]
    %v72 = vld [vmem:[#allocation5 + $0x8] sm:$0xff]
    %v73 = vsub.f32 %v69, %v71
    %v74 = vsub.f32 %v70, %v72
    %v75 = vand.u32 2147483647, %v73
    %v76 = vand.u32 2147483647, %v74
    %vm77 = vcmp.ge.f32.partialorder %v75, 2.0
    %vm78 = vcmp.ge.f32.partialorder %v76, 2.0
    %v79 = vsel %vm77, 0.0, %v75
    %v80 = vsel %vm78, 0.0, %v76
    %v81 = vld [vmem:[#allocation7] sm:$0xff]
    %v82 = vadd.f32 %v79, %v80
    %v83 = vadd.f32 %v81, %v82
    %84 = vst [vmem:[#allocation7] sm:$0xff] %v83
    // Predicated region
    $region22: #{tpu_custom_call.1} parent=1 // pred_check
      _
    $region23: #{tpu_custom_call.1} parent=1 // pred_check_branch
      %86 = sbr.rel (0) target = $region25
    $region24: #{tpu_custom_call.1} parent=1 // pred_region
      %88 = vsyncadd [#allocation4], 0
      %s90 = sshll.u32 [#allocation7], 4
      %s91 = int_to_ptr.vmem [resolvable:$true] %s90
      %s92 = sshll.u32 %s2, 4
      %s93 = int_to_ptr.hbm [resolvable:$true] %s92
      %95 = dma.vmem_to_hbm [thread:$0]  %s91, 128, %s93, [#allocation4]
    $region25: #{tpu_custom_call.1} parent=1 // pred_fallthru
      _
    // Predicated region
    $region26: #{tpu_custom_call.1} parent=1 // pred_check
      _
    $region27: #{tpu_custom_call.1} parent=1 // pred_check_branch
      %97 = sbr.rel (0) target = $region29
    $region28: #{tpu_custom_call.1} parent=1 // pred_region
      %99 = dma.done [#allocation4], 128
    $region29: #{tpu_custom_call.1} parent=1 // pred_fallthru
      _
    %100 = vsyncpa [#allocation3], 1
    %101 = vsyncpa [#allocation6], 1
    %102 = vsyncpa [#allocation4], 1

</llo_original>
